<compile_context>
chip_gen: v5e
topology: v5e:2x2
jax: 0.10.0
libtpu: 0.0.40
codegen_flags: <defaults>
</compile_context>

<pallas_src>
import jax
import jax.numpy as jnp
from jax.experimental import pallas as pl
from jax.experimental.pallas import tpu as pltpu


def _round_up(v, m):
    return (v + m - 1) // m * m


def _vmem_limit_bytes():
    """Generation-aware scoped-VMEM limit: 64 MiB on v5e/v6e, 32 MiB on v7x."""
    cap = None
    try:
        info = pltpu.get_tpu_info()
        cap = getattr(info, "vmem_capacity_bytes", None)
    except Exception:
        cap = None
    if cap is None or cap <= 64 * 1024 * 1024:       # unknown or v7x-class (64 MiB/TC)
        return 32 * 1024 * 1024
    return 64 * 1024 * 1024                          # v5e / v6e (128 MiB physical)


def _choose_tm(m, k, n, in_bytes, out_bytes, budget_bytes):
    """Pick an M tile: multiple of 16, <=1024, double-buffered footprint within budget,
    and >= 2 grid steps when there is enough work (v7x megacore)."""
    # Weight + bias are double-buffered by the pipeline even with a constant
    # index map (see TODO on pl.Buffered(1)).
    resident = 2 * (k * n * in_bytes) + 2 * (n * 4)
    per_row = 2 * (k * in_bytes + n * out_bytes)      # 2x-buffered patch + out tile rows
    avail = budget_bytes - resident
    if avail < per_row * 16:
        # TODO(synk): add an N grid axis (tile the weight) for very large emb_dim*K.
        raise ValueError(
            f"PatchEmbed weight ({k}x{n}) too large for the VMEM budget "
            f"({budget_bytes} B); N tiling not implemented.")
    tm = min(1024, avail // per_row)
    tm = max(16, (int(tm) // 16) * 16)
    tm = min(tm, _round_up(m, 16))
    # Guarantee >= 2 grid steps when possible so both v7x TensorCores get work.
    if m > 16 and -(-m // tm) < 2:
        tm = max(16, _round_up(-(-m // 2), 16))
    return tm


def _patch_embed_kernel(p_ref, w_ref, b_ref, o_ref):
    # p_ref: (TM, K) bf16 | w_ref: (K, N) bf16 | b_ref: (1, N) f32 | o_ref: (TM, N)
    acc = jnp.dot(p_ref[...], w_ref[...], preferred_element_type=jnp.float32)
    o_ref[...] = (acc + b_ref[...]).astype(o_ref.dtype)


def patch_embed(x, weight, bias, patch_size, *, compute_dtype=jnp.bfloat16,
                out_dtype=None):
    """
    Args:
        x:      (B, C, T, F) spectrogram batch (same layout as the PyTorch input).
        weight: (emb_dim, C*pt*pf)  nn.Linear weight (out_features, in_features).
        bias:   (emb_dim,)          nn.Linear bias.
        patch_size: (pt, pf)
        out_dtype: output dtype (default: x.dtype). Pass bf16 if the downstream
            transformer consumes bf16 anyway — halves the output HBM write.
    Returns:
        (B, num_patches, emb_dim).
    """
    B, C, T, F = x.shape
    pt, pf = patch_size
    assert T % pt == 0 and F % pf == 0
    nt, nf = T // pt, F // pf
    num_patches = nt * nf
    K = C * pt * pf
    emb_dim = weight.shape[0]
    out_dtype = x.dtype if out_dtype is None else out_dtype

    # --- patchify: identical index order to unfold/unfold/view/permute/view ---
    # (B,C,T,F) -> (B,C,nt,pt,nf,pf) -> (B,nt,nf,C,pt,pf) -> (B*num_patches, K)
    # Pure layout + cast; allow_input_fusion below lets XLA fold this producer
    # into the pallas_call input DMA (no staged bf16 patch tensor in HBM).
    patches = x.reshape(B, C, nt, pt, nf, pf)
    patches = jnp.transpose(patches, (0, 2, 4, 1, 3, 5))
    patches = patches.reshape(B * num_patches, K).astype(compute_dtype)

    w_t = weight.T.astype(compute_dtype)                     # (K, emb_dim)
    b2 = bias.astype(jnp.float32).reshape(1, emb_dim)        # (1, emb_dim)

    M = B * num_patches
    in_bytes = jnp.dtype(compute_dtype).itemsize
    out_bytes = jnp.dtype(out_dtype).itemsize
    vmem_limit = _vmem_limit_bytes()
    tm = _choose_tm(M, K, emb_dim, in_bytes, out_bytes,
                    budget_bytes=(3 * vmem_limit) // 4)

    grid = (pl.cdiv(M, tm),)
    out = pl.pallas_call(
        _patch_embed_kernel,
        out_shape=jax.ShapeDtypeStruct((M, emb_dim), out_dtype),
        grid=grid,
        in_specs=[
            pl.BlockSpec((tm, K), lambda i: (i, 0)),          # patch tile (pipelined)
            pl.BlockSpec((K, emb_dim), lambda i: (0, 0)),     # weight, VMEM-resident
            pl.BlockSpec((1, emb_dim), lambda i: (0, 0)),     # bias, VMEM-resident
        ],
        out_specs=pl.BlockSpec((tm, emb_dim), lambda i: (i, 0)),
        compiler_params=pltpu.CompilerParams(
            dimension_semantics=("parallel",),                # megacore split on v7x
            vmem_limit_bytes=vmem_limit,
            allow_input_fusion=[True, False, False],          # fuse patchify into DMA
        ),
    )(patches, w_t, b2)

    return out.reshape(B, num_patches, emb_dim)


if __name__ == "__main__":
    # Module config: in_channels=4, patch_size=(4, 4), emb_dim=32
    B, C, T, F = 2, 4, 16, 16
    pt, pf = 4, 4
    emb_dim = 32
    K = C * pt * pf

    key = jax.random.PRNGKey(0)
    kx, kw, kb = jax.random.split(key, 3)
    x = jax.random.normal(kx, (B, C, T, F), dtype=jnp.float32)
    # deterministic "nn.Linear"-style init (uniform in +/- 1/sqrt(K))
    bound = 1.0 / (K ** 0.5)
    weight = jax.random.uniform(kw, (emb_dim, K), jnp.float32, -bound, bound)
    bias = jax.random.uniform(kb, (emb_dim,), jnp.float32, -bound, bound)

    fn = jax.jit(patch_embed, static_argnums=(3,))
    out = fn(x, weight, bias, (pt, pf))
    out = jax.block_until_ready(out)

    # pure-JAX f32 reference
    nt, nf = T // pt, F // pf
    ref = x.reshape(B, C, nt, pt, nf, pf).transpose(0, 2, 4, 1, 3, 5)
    ref = ref.reshape(B, nt * nf, K) @ weight.T + bias

    assert out.shape == (B, nt * nf, emb_dim)
    assert out.dtype == x.dtype
    # bf16 operands with f32 MXU accumulation -> relaxed tolerance vs f32 reference.
    max_err = float(jnp.max(jnp.abs(out - ref)))
    assert jnp.allclose(out, ref, atol=2e-2, rtol=2e-2), f"max_err={max_err}"

    print("KERNEL_OK")
</pallas_src>

<mosaic_0001>
module attributes {stable_mosaic.version = 11 : i64} {
  func.func @_patch_embed_kernel(%arg0: i32, %arg1: memref<16x64xbf16, #tpu.memory_space<vmem>>, %arg2: memref<64x32xbf16, #tpu.memory_space<vmem>>, %arg3: memref<1x32xf32, #tpu.memory_space<vmem>>, %arg4: memref<16x32xf32, #tpu.memory_space<vmem>>) attributes {dimension_semantics = [#tpu.dimension_semantics<parallel>], iteration_bounds = array<i64: 2>, scalar_prefetch = 0 : i64, scratch_operands = 0 : i64, tpu.core_type = #tpu.core_type<tc>, window_params = [{transform_indices = @transform_0, window_bounds = array<i64: 16, 64>}, {pipeline_mode = #tpu.pipeline_mode<synchronous>, transform_indices = @transform_1, window_bounds = array<i64: 64, 32>}, {pipeline_mode = #tpu.pipeline_mode<synchronous>, transform_indices = @transform_2, window_bounds = array<i64: 1, 32>}, {transform_indices = @transform_3, window_bounds = array<i64: 16, 32>}]} {
    %c0 = arith.constant 0 : index
    %c0_0 = arith.constant 0 : index
    %0 = vector.load %arg1[%c0, %c0_0] : memref<16x64xbf16, #tpu.memory_space<vmem>>, vector<16x64xbf16>
    %c0_1 = arith.constant 0 : index
    %c0_2 = arith.constant 0 : index
    %1 = vector.load %arg2[%c0_1, %c0_2] : memref<64x32xbf16, #tpu.memory_space<vmem>>, vector<64x32xbf16>
    %cst = arith.constant dense<0.000000e+00> : vector<16x32xf32>
    %2 = tpu.matmul %0, %1, %cst {dimension_numbers = #tpu.dot_dimension_numbers<[1], [0], [0], [1], [0, 0, 1, 1], [], []>} : vector<16x64xbf16>, vector<64x32xbf16>, vector<16x32xf32> -> vector<16x32xf32>
    %c0_3 = arith.constant 0 : index
    %c0_4 = arith.constant 0 : index
    %3 = vector.load %arg3[%c0_3, %c0_4] : memref<1x32xf32, #tpu.memory_space<vmem>>, vector<1x32xf32>
    %4 = vector.broadcast %3 : vector<1x32xf32> to vector<16x32xf32>
    %5 = arith.addf %2, %4 : vector<16x32xf32>
    %c0_5 = arith.constant 0 : index
    %c0_6 = arith.constant 0 : index
    %6 = vector.load %arg4[%c0_5, %c0_6] : memref<16x32xf32, #tpu.memory_space<vmem>>, vector<16x32xf32>
    tpu.vector_store %arg4[%c0_5, %c0_6], %5 {strides = array<i32>} : memref<16x32xf32, #tpu.memory_space<vmem>>, vector<16x32xf32>,
    return
  }
  func.func @transform_0(%arg0: i32) -> (i32, i32) {
    %c0_i32 = arith.constant 0 : i32
    %c0_i32_0 = arith.constant 0 : i32
    return %arg0, %c0_i32 : i32, i32
  }
  func.func @transform_1(%arg0: i32) -> (i32, i32) {
    %c0_i32 = arith.constant 0 : i32
    %c0_i32_0 = arith.constant 0 : i32
    %c0_i32_1 = arith.constant 0 : i32
    return %c0_i32, %c0_i32_0 : i32, i32
  }
  func.func @transform_2(%arg0: i32) -> (i32, i32) {
    %c0_i32 = arith.constant 0 : i32
    %c0_i32_0 = arith.constant 0 : i32
    %c0_i32_1 = arith.constant 0 : i32
    return %c0_i32, %c0_i32_0 : i32, i32
  }
  func.func @transform_3(%arg0: i32) -> (i32, i32) {
    %c0_i32 = arith.constant 0 : i32
    %c0_i32_0 = arith.constant 0 : i32
    return %arg0, %c0_i32 : i32, i32
  }
}

</mosaic_0001>

<llo_original>
// kernel: patch_embed.1
$region0: #{patch_embed.1}
  #allocation0 [shape = 'u32[]', space=smem, size = 0x4, offset = 0x4, fixed_abs, tag = 'smem constant byte address 0x4 - core index']
  #allocation1 [shape = 'u32[72,128]{1,0:T(1,128)}', space=vmem, size = 0x9000, scoped, tag = 'internal scratch']
  %s0 = inlined_call_operand.vmem [shape: bf16[32,64], index: 0, kind: input, shape index: {}]
  %s1 = inlined_call_operand.vmem [shape: bf16[64,32], index: 1, kind: input, shape index: {}]
  %s2 = inlined_call_operand.vmem [shape: f32[1,32], index: 2, kind: input, shape index: {}]
  %s3 = inlined_call_operand.hbm [shape: f32[32,32], index: 3, kind: output, shape index: {}]
  %s4 = sld [smem:[#allocation0]]
  $region45: #{patch_embed.1} parent=0
    _
  %s6 = ssub.s32 1, %s4
  %s7 = scalar_select 0, %s6, %s4
  $region1: #{patch_embed.1} parent=0
    #allocation2 [shape = 'u8[16384]{0}', space=vmem, size = 0x4000, scoped, tag = 'output window, operand 0']
    #allocation3 [shape = 's32[2]{0}', space=sflag, size = 0x8, scoped, tag = 'scoped memory for patch_embed.1']
    %8 = vsyncpa [#allocation3], 0
    %s9 = scalar_lea.sflag [#allocation3], 1
    %10 = vsyncpa %s9, 0
    loop: start=0, step=1, limit=4
    $region2: #{patch_embed.1} parent=1 // loop_pre_header
      _
    $region3: #{patch_embed.1} parent=1 // loop_header
      %s12 = sphi 0, %s16
      %p13 = scmp.ge.s32.totalorder %s12, 4
      %s22 = sphi 0, %s24
      %s25 = sphi 0, %s22
      %s26 = sphi 0, %s25
      %s42 = sphi 0, %s26
      %s46 = sphi 0, %s46
      %s48 = sphi 0, %s46
      %s49 = sphi 0, %s48
      %s63 = sphi 0, %s49
      %s67 = sphi 0, %s67
      %s69 = sphi 0, %s67
      %s70 = sphi 0, %s69
      %s84 = sphi 0, %s70
      %s90 = sphi 0, %s92
      %s93 = sphi 0, %s90
      %s94 = sphi 0, %s93
      %s110 = sphi 0, %s94
    $region4: #{patch_embed.1} parent=1 // loop_header_branch
      %15 = sbr.rel (%p13) target = $region8
    $region5: #{patch_embed.1} parent=1 // loop_body
      %s17 = ssub.s32 %s12, 1
      %s18 = ssub.s32 %s12, 2
      %s19 = sadd.s32 %s12, 1
      %s20 = ssub.s32 %s12, %s19
      %p21 = scmp.eq.s32.totalorder %s20, 0
      %s23 = sadd.s32 %s22, 1
      %s24 = scalar_select %p21, %s22, %s23
      %p27 = pneg %p21
      %p28 = scmp.eq.s32.totalorder %s12, 1
      %p29 = por %p27, %p28
      %p30 = scmp.ne.s32.totalorder %s22, %s25
      %p31 = scmp.eq.s32.totalorder %s12, 0
      %p32 = por %p30, %p31
      %p33 = scmp.ne.s32.totalorder %s22, %s25
      %p34 = scmp.eq.s32.totalorder %s17, 1
      %p35 = por %p33, %p34
      %p36 = scmp.ne.s32.totalorder %s25, %s26
      %p37 = scmp.eq.s32.totalorder %s17, 0
      %p38 = por %p36, %p37
      %p39 = scmp.ne.s32.totalorder %s25, %s26
      %p40 = scmp.eq.s32.totalorder %s18, 1
      %p41 = por %p39, %p40
      %p43 = scmp.ne.s32.totalorder %s26, %s42
      %p44 = scmp.eq.s32.totalorder %s18, 0
      %p45 = por %p43, %p44
      %s47 = sadd.s32 %s46, 1
      %p50 = scmp.eq.s32.totalorder %s12, 1
      %p51 = scmp.ne.s32.totalorder %s46, %s48
      %p52 = scmp.eq.s32.totalorder %s12, 0
      %p53 = por %p51, %p52
      %p54 = scmp.ne.s32.totalorder %s46, %s48
      %p55 = scmp.eq.s32.totalorder %s17, 1
      %p56 = por %p54, %p55
      %p57 = scmp.ne.s32.totalorder %s48, %s49
      %p58 = scmp.eq.s32.totalorder %s17, 0
      %p59 = por %p57, %p58
      %p60 = scmp.ne.s32.totalorder %s48, %s49
      %p61 = scmp.eq.s32.totalorder %s18, 1
      %p62 = por %p60, %p61
      %p64 = scmp.ne.s32.totalorder %s49, %s63
      %p65 = scmp.eq.s32.totalorder %s18, 0
      %p66 = por %p64, %p65
      %s68 = sadd.s32 %s67, 1
      %p71 = scmp.eq.s32.totalorder %s12, 1
      %p72 = scmp.ne.s32.totalorder %s67, %s69
      %p73 = scmp.eq.s32.totalorder %s12, 0
      %p74 = por %p72, %p73
      %p75 = scmp.ne.s32.totalorder %s67, %s69
      %p76 = scmp.eq.s32.totalorder %s17, 1
      %p77 = por %p75, %p76
      %p78 = scmp.ne.s32.totalorder %s69, %s70
      %p79 = scmp.eq.s32.totalorder %s17, 0
      %p80 = por %p78, %p79
      %p81 = scmp.ne.s32.totalorder %s69, %s70
      %p82 = scmp.eq.s32.totalorder %s18, 1
      %p83 = por %p81, %p82
      %p85 = scmp.ne.s32.totalorder %s70, %s84
      %p86 = scmp.eq.s32.totalorder %s18, 0
      %p87 = por %p85, %p86
      %s88 = ssub.s32 %s12, %s19
      %p89 = scmp.eq.s32.totalorder %s88, 0
      %s91 = sadd.s32 %s90, 1
      %s92 = scalar_select %p89, %s90, %s91
      %p95 = pneg %p89
      %p96 = scmp.eq.s32.totalorder %s12, 1
      %p97 = por %p95, %p96
      %p98 = scmp.ne.s32.totalorder %s90, %s93
      %p99 = scmp.eq.s32.totalorder %s12, 0
      %p100 = por %p98, %p99
      %p101 = scmp.ne.s32.totalorder %s90, %s93
      %p102 = scmp.eq.s32.totalorder %s17, 1
      %p103 = por %p101, %p102
      %p104 = scmp.ne.s32.totalorder %s93, %s94
      %p105 = scmp.eq.s32.totalorder %s17, 0
      %p106 = por %p104, %p105
      %p107 = scmp.ne.s32.totalorder %s93, %s94
      %p108 = scmp.eq.s32.totalorder %s18, 1
      %p109 = por %p107, %p108
      %p111 = scmp.ne.s32.totalorder %s94, %s110
      %p112 = scmp.eq.s32.totalorder %s18, 0
      %p113 = por %p111, %p112
      %p114 = scmp.le.s32.totalorder 1, %s12
      %p115 = scmp.lt.s32.totalorder %s12, 3
      %p116 = pnand %p114, %p115
      %p117 = pneg %p116
      // Predicated region
      $region9: #{patch_embed.1} parent=5 // pred_check
        _
      $region10: #{patch_embed.1} parent=5 // pred_check_branch
        %119 = sbr.rel (%p116) target = $region12
      $region11: #{patch_embed.1} parent=5 // pred_region
        %s120 = ssub.s32 %s12, 1
        // Predicated region
        $region13: #{patch_embed.1} parent=11 // pred_check
          %p121 = pneg %p59
        $region14: #{patch_embed.1} parent=11 // pred_check_branch
          %123 = sbr.rel (%p121) target = $region16
        $region15: #{patch_embed.1} parent=11 // pred_region
          _
        $region16: #{patch_embed.1} parent=11 // pred_fallthru
          _
        // Predicated region
        $region17: #{patch_embed.1} parent=11 // pred_check
          %p124 = pneg %p80
        $region18: #{patch_embed.1} parent=11 // pred_check_branch
          %126 = sbr.rel (%p124) target = $region20
        $region19: #{patch_embed.1} parent=11 // pred_region
          _
        $region20: #{patch_embed.1} parent=11 // pred_fallthru
          _
      $region12: #{patch_embed.1} parent=5 // pred_fallthru
        _
      %p127 = scmp.lt.s32.totalorder %s12, 2
      // Predicated region
      $region21: #{patch_embed.1} parent=5 // pred_check
        %p128 = pneg %p127
      $region22: #{patch_embed.1} parent=5 // pred_check_branch
        %130 = sbr.rel (%p128) target = $region24
      $region23: #{patch_embed.1} parent=5 // pred_region
        // Predicated region
        $region25: #{patch_embed.1} parent=23 // pred_check
          %p131 = pneg %p32
        $region26: #{patch_embed.1} parent=23 // pred_check_branch
          %133 = sbr.rel (%p131) target = $region28
        $region27: #{patch_embed.1} parent=23 // pred_region
          %s134 = smul.u32 2, %s12
          %p135 = scmp.lt.s32.totalorder %s134, 3
          %s136 = scalar_select %p135, %s134, 3
          %s137 = smul.addr %s136, 4
          %s138 = scalar_lea.vmem %s0, %s137
          %s139 = smul.u32 2, %s12
        $region28: #{patch_embed.1} parent=23 // pred_fallthru
          _
      $region24: #{patch_embed.1} parent=5 // pred_fallthru
        _
      %p140 = scmp.le.s32.totalorder 1, %s12
      %p141 = scmp.lt.s32.totalorder %s12, 3
      %p142 = pnand %p140, %p141
      %p143 = pneg %p142
      // Predicated region
      $region29: #{patch_embed.1} parent=5 // pred_check
        _
      $region30: #{patch_embed.1} parent=5 // pred_check_branch
        %145 = sbr.rel (%p142) target = $region32
      $region31: #{patch_embed.1} parent=5 // pred_region
        %s146 = ssub.s32 %s12, 1
        %s147 = smul.u32 2, %s17
        %p148 = scmp.lt.s32.totalorder %s147, 3
        %s149 = scalar_select %p148, %s147, 3
        %s150 = smul.addr %s149, 4
        %s151 = scalar_lea.vmem %s0, %s150
        %p152 = pneg %p38
        %p153 = pneg %p35
        %p154 = pneg %p59
        %p155 = pneg %p56
        %p156 = pneg %p80
        %p157 = pneg %p77
        %p158 = pneg %p106
        %p159 = pneg %p103
        %s160 = sand.u32 %s93, 1
        %s161 = scalar_lea.sflag [#allocation3], %s160
        %s162 = sand.u32 %s93, 1
        %s163 = smul.addr %s162, 16
        %s164 = scalar_lea.vmem [#allocation2], %s163
        %s165 = smul.u32 2, %s17
        %p166 = scmp.lt.s32.totalorder %s165, 3
        %s167 = scalar_select %p166, %s165, 3
        %s168 = smul.addr %s167, 4
        %s169 = scalar_lea.vmem %s0, %s168
        %s170 = smul.u32 2, %s17
        %s171 = smul.u32 2, %s17
        %v173 = vld [vmem:[%s169] sm:$0xf]
        %v174 = vld [vmem:[%s169 + $0x4] sm:$0xf]
        %v175 = vld [vmem:[%s1] sm:$0xf]
        %v176 = vld [vmem:[%s1 + $0x4] sm:$0xf]
        %v177 = vld [vmem:[%s1 + $0x8] sm:$0xf]
        %v178 = vld [vmem:[%s1 + $0xc] sm:$0xf]
        %v179 = vld [vmem:[%s1 + $0x10] sm:$0xf]
        %v180 = vld [vmem:[%s1 + $0x14] sm:$0xf]
        %v181 = vld [vmem:[%s1 + $0x18] sm:$0xf]
        %v182 = vld [vmem:[%s1 + $0x1c] sm:$0xf]
        %v183 = vld [vmem:[%s2] sm:$0x1]
        %v185 = vperm.slane %v183, 0
        %v189 = vunpack.c.l.b16 %v173
        %v190 = vunpack.c.l.b16 %v174
        %v191 = vpack.c.b16 %v190, %v189
        %v200 = vunpack.c.l.b16 %v175
        %v201 = vunpack.c.l.b16 %v176
        %v202 = vunpack.c.l.b16 %v177
        %v203 = vunpack.c.l.b16 %v178
        %v204 = vunpack.c.l.b16 %v179
        %v205 = vunpack.c.l.b16 %v180
        %v206 = vunpack.c.l.b16 %v181
        %v207 = vunpack.c.l.b16 %v182
        %v208 = vpack.c.b16 %v201, %v200
        %v209 = vpack.c.b16 %v203, %v202
        %v210 = vpack.c.b16 %v205, %v204
        %v211 = vpack.c.b16 %v207, %v206
        %vm216 = vcmask 523264
        %v218 = vsel %vm216, %v191, 0
        %220 = vmatpush.bf16.msra.mxu0 0
        %221 = vmatpush.bf16.msra.mxu0 0
        %222 = vmatpush.bf16.msra.mxu0 0
        %223 = vmatpush.bf16.msra.mxu0 0
        %224 = vmatpush.bf16.msra.mxu0 %v211
        %225 = vmatpush.bf16.msra.mxu0 %v210
        %226 = vmatpush.bf16.msra.mxu0 %v209
        %227 = vmatpush.bf16.msra.mxu0 %v208
        %228 = vmatmul.bf16.gmra.mxu0 %v218
        %v229 = vpop.f32.mrf.mxu0
        %v230 = vadd.f32 %v185, %v229
        %v231 = vpop.f32.mrf.mxu0
        %v232 = vadd.f32 %v185, %v231
        %233 = vdwg.mxu0
        %vm234 = vcmask 261120
        %235 = vst.msk [vmem:[%s164] sm:$0xff] %vm234, %v230
        %236 = vst.msk [vmem:[%s164 + $0x8] sm:$0xff] %vm234, %v232
        %s237 = sand.u32 %s93, 1
        %s238 = scalar_lea.sflag [#allocation3], %s237
        %s239 = sand.u32 %s93, 1
        %s240 = smul.addr %s239, 16
        %s241 = scalar_lea.vmem [#allocation2], %s240
        // Predicated region
        $region33: #{patch_embed.1} parent=31 // pred_check
          %p242 = pneg %p103
        $region34: #{patch_embed.1} parent=31 // pred_check_branch
          %244 = sbr.rel (%p242) target = $region36
        $region35: #{patch_embed.1} parent=31 // pred_region
          %s245 = smul.u32 2, %s17
          %247 = vsyncadd %s238, 0
          %s248 = smul.addr %s245, 8
          %s249 = scalar_lea.hbm %s3, %s248
          %s250 = sshll.u32 %s241, 4
          %s251 = int_to_ptr.vmem [resolvable:$true] %s250
          %s252 = sshll.u32 %s249, 4
          %s253 = int_to_ptr.hbm [resolvable:$true] %s252
          %258 = dma.vmem_to_hbm [thread:$0]  %s251, 256, %s253, %s238, 128, 128, 8
        $region36: #{patch_embed.1} parent=31 // pred_fallthru
          _
      $region32: #{patch_embed.1} parent=5 // pred_fallthru
        _
      %p259 = scmp.le.s32.totalorder 2, %s12
      // Predicated region
      $region37: #{patch_embed.1} parent=5 // pred_check
        %p260 = pneg %p259
      $region38: #{patch_embed.1} parent=5 // pred_check_branch
        %262 = sbr.rel (%p260) target = $region40
      $region39: #{patch_embed.1} parent=5 // pred_region
        %s263 = ssub.s32 %s12, 2
        // Predicated region
        $region41: #{patch_embed.1} parent=39 // pred_check
          %p264 = pneg %p109
        $region42: #{patch_embed.1} parent=39 // pred_check_branch
          %266 = sbr.rel (%p264) target = $region44
        $region43: #{patch_embed.1} parent=39 // pred_region
          %s267 = sand.u32 %s94, 1
          %s268 = scalar_lea.sflag [#allocation3], %s267
          %s269 = sand.u32 %s94, 1
          %s270 = smul.addr %s269, 16
          %s271 = scalar_lea.vmem [#allocation2], %s270
          %273 = dma.done %s268, 256
        $region44: #{patch_embed.1} parent=39 // pred_fallthru
          _
      $region40: #{patch_embed.1} parent=5 // pred_fallthru
        _
    $region6: #{patch_embed.1} parent=1 // loop_footer
      %s16 = sadd.s32 1, %s12
    $region7: #{patch_embed.1} parent=1 // loop_footer_branch
      %11 = sbr.rel target = $region3
    $region8: #{patch_embed.1} parent=1 // loop_exit
      _
    %274 = vsyncpa [#allocation3], 1
    %s275 = scalar_lea.sflag [#allocation3], 1
    %276 = vsyncpa %s275, 1

</llo_original>
